<compile_context>
chip_gen: v6e
topology: v6e:2x2x1
jax: 0.10.0
libtpu: 0.0.40
codegen_flags: <defaults>
</compile_context>

<pallas_src>
import math
import functools

import jax
import jax.numpy as jnp
from jax import lax
from jax.experimental import pallas as pl
from jax.experimental.pallas import tpu as pltpu  # noqa: F401  (TPU backend)


# ----------------------------- configuration -------------------------------
B = 2                # batch
N = 8                # number of nodes
C_IN = 16            # in_channels
D = 8                # out_channels (per-head dim)
H = 4                # num_heads
M = 10               # nb_random_features
TAU = 0.25
EPS = 1e-6           # numerical_stabilizer in softmax_kernel_transformation


# ------------------------- projection matrix (glue) ------------------------
def create_projection_matrix(key, m, d):
    """JAX port of NodeFormer's create_projection_matrix (scaling=0)."""
    nb_full_blocks = m // d
    keys = jax.random.split(key, nb_full_blocks + 2)
    blocks = []
    for i in range(nb_full_blocks):
        ub = jax.random.normal(keys[i], (d, d), dtype=jnp.float32)
        q, _ = jnp.linalg.qr(ub)
        blocks.append(q.T)
    remaining = m - nb_full_blocks * d
    if remaining > 0:
        ub = jax.random.normal(keys[nb_full_blocks], (d, d), dtype=jnp.float32)
        q, _ = jnp.linalg.qr(ub)
        blocks.append(q.T[:remaining])
    final = jnp.vstack(blocks)                                    # [m, d]
    multiplier = jnp.linalg.norm(
        jax.random.normal(keys[-1], (m, d), dtype=jnp.float32), axis=1)
    return multiplier[:, None] * final                            # [m, d]


# ------------------------------- Pallas kernel ------------------------------
def gkamp_kernel(x_ref, w_in_ref, rf_ref, consts_ref, out_ref, *,
                 num_batches, nodes, num_heads, num_feat, head_dim, out_ch):
    """Single invocation: all batches/heads, 7 MXU pushes, 1 output store."""
    bn = num_batches * nodes
    hd = num_heads * head_dim
    hm = num_heads * num_feat
    ratio = 1.0 / math.sqrt(float(num_feat))

    # Fused input projection: [q|k (pre-scaled) | v], biases folded via the ones
    # column of x_aug and the bias row of w_in.  1 matmul.
    qkv = jnp.dot(x_ref[...], w_in_ref[...],
                  preferred_element_type=jnp.float32)              # [BN, 3HD]
    qk = qkv[:, :2 * hd]                                           # [BN, 2HD]
    v = qkv[:, 2 * hd:]                                            # [BN, HD]

    # Random features AND the -0.5*||x||^2 diag term in ONE matmul:
    # lhs = [qk | qk*qk]  (exactly 128 lanes), rf = vstack([P_bd, -D_bd]).
    lhs = jnp.concatenate([qk, qk * qk], axis=1)                   # [BN, 4HD]
    shifted = jnp.dot(lhs, rf_ref[...],
                      preferred_element_type=jnp.float32)          # [BN, 2HM]

    # Softmax-kernel stabilizers, computed on `shifted` (per-head / global shifts
    # cancel in num/den up to EPS, so this matches the reference to ~1e-4).
    lane = lax.broadcasted_iota(jnp.int32, (bn, 2 * hm), 1)
    stab = jnp.zeros_like(shifted)
    for h in range(num_heads):                     # query: per-(row, head) max
        in_head = (lane >= h * num_feat) & (lane < (h + 1) * num_feat)
        mh = jnp.max(jnp.where(in_head, shifted, -1e30), axis=-1, keepdims=True)
        stab = jnp.where(in_head, mh, stab)
    is_k = lane >= hm                              # key: single global max
    k_stab = jnp.max(jnp.where(is_k, shifted, -1e30))
    stab = jnp.where(is_k, k_stab, stab)

    prime = ratio * (jnp.exp(shifted - stab) + EPS)                # [BN, 2HM]
    q_prime = prime[:, :hm]                                        # [BN, HM]
    k_prime = prime[:, hm:]                                        # [BN, HM]

    mask2 = consts_ref[:hm, :]                                     # [HM, 2HD]
    v_aug = jnp.concatenate([v, jnp.ones_like(v)], axis=1)         # [BN, 2HD]

    # Linear attention: node aggregation must not mix batches -> tiny static loop.
    z_parts = []
    for b in range(num_batches):
        r0 = b * nodes
        qb = q_prime[r0:r0 + nodes, :]                             # [N, HM]
        kb = k_prime[r0:r0 + nodes, :]                             # [N, HM]
        vb = v_aug[r0:r0 + nodes, :]                               # [N, 2HD]
        # k'^T [v | 1] without an explicit transpose: lanes 0:HD give k'^T v,
        # lanes HD:2HD give sum_n k' broadcast over the head's D lanes.
        kv_aug = lax.dot_general(kb, vb, (((0,), (0,)), ((), ())),
                                 preferred_element_type=jnp.float32)  # [HM, 2HD]
        # numer and denom in ONE matmul (per-head block masking via mask2).
        nd = jnp.dot(qb, kv_aug * mask2,
                     preferred_element_type=jnp.float32)           # [N, 2HD]
        numer = nd[:, :hd]
        denom = nd[:, hd:]
        z_parts.append(numer * pl.reciprocal(denom, approx=True))  # [N, HD]

    # Single Wo projection + single full-array store for both batches.
    z_all = jnp.concatenate(z_parts, axis=0)                       # [BN, HD]
    wo = consts_ref[hm:hm + hd, :out_ch]                           # [HD, OUT]
    bo = consts_ref[hm + hd:hm + hd + 1, :out_ch]                  # [1, OUT]
    out_ref[...] = jnp.dot(z_all, wo, preferred_element_type=jnp.float32) + bo


# ----------------------------- parameter packing ----------------------------
def pack_gkamp_params(params, proj_matrix, tau):
    """One-time packing of module weights into 3 fused operand slabs."""
    wq, bq, wk, bk, wv, bv, wo, bo = params
    m, d = proj_matrix.shape
    c = wq.shape[0]
    h = wq.shape[1] // d
    hd = h * d
    hm = h * m
    out_ch = wo.shape[1]

    # Fold 1/sqrt(tau) (attention temperature) and d**-0.25 (Performer data
    # normalizer) into the fused q|k weight so the kernel never rescales.
    scale = (1.0 / math.sqrt(float(tau))) / math.sqrt(math.sqrt(float(d)))

    # w_in: block-diag [Wq|Wk (scaled), Wv] with all biases in the last row
    # (consumed by the ones column appended to [feat | z]).
    w_in = jnp.zeros((2 * c + 1, 3 * hd), jnp.float32)
    w_in = w_in.at[:c, :2 * hd].set(jnp.concatenate([wq, wk], axis=1) * scale)
    w_in = w_in.at[c:2 * c, 2 * hd:].set(wv)
    w_in = w_in.at[2 * c, :2 * hd].set(
        jnp.concatenate([bq, bk], axis=1)[0] * scale)
    w_in = w_in.at[2 * c, 2 * hd:].set(bv[0])

    # rf: one slab producing `shifted = qk_dash - 0.5*||qk||^2` directly from
    # lhs = [qk | qk*qk] (128-lane contraction).
    eye2h = jnp.eye(2 * h, dtype=jnp.float32)
    p_bd = jnp.kron(eye2h, proj_matrix.T.astype(jnp.float32))       # [2HD, 2HM]
    d_bd = 0.5 * jnp.kron(eye2h, jnp.ones((d, m), jnp.float32))     # [2HD, 2HM]
    rf = jnp.concatenate([p_bd, -d_bd], axis=0)                     # [4HD, 2HM]

    # consts: per-head mask tiled for the fused numer|denom matmul, plus Wo and
    # bo packed below it (all sublane offsets are multiples of 8).
    mask2 = jnp.tile(jnp.kron(jnp.eye(h, dtype=jnp.float32),
                              jnp.ones((m, d), jnp.float32)), (1, 2))  # [HM, 2HD]
    nrows = ((hm + hd + 1 + 7) // 8) * 8
    consts = jnp.zeros((nrows, 2 * hd), jnp.float32)
    consts = consts.at[:hm, :].set(mask2)
    consts = consts.at[hm:hm + hd, :out_ch].set(wo)
    consts = consts.at[hm + hd, :out_ch].set(bo[0])

    return (w_in, rf, consts, h, m, d, out_ch)


# --------------------------------- wrapper ----------------------------------
def gkamp_forward(z, feat, adjs, tau, packed):
    """Eval-mode GKAMP forward.  adjs is unused (rb_order=0, no edge loss); tau is
    already folded into the packed q|k weights."""
    del adjs, tau  # TODO(synk): adjacency only feeds gumbel / relational-bias paths
    (w_in, rf, consts, h, m, d, out_ch) = packed
    bsz, nn, _ = feat.shape
    bn = bsz * nn
    hd = h * d
    hm = h * m

    # Fold the batch and append a ones column (consumes the bias row of w_in).
    x_aug = jnp.concatenate(
        [feat.reshape(bn, -1), z.reshape(bn, -1),
         jnp.ones((bn, 1), jnp.float32)], axis=1)                   # [BN, 2C+1]

    kern = functools.partial(gkamp_kernel, num_batches=bsz, nodes=nn,
                             num_heads=h, num_feat=m, head_dim=d, out_ch=out_ch)

    # Advisory cost estimate so XLA schedules/overlaps the call sensibly.
    flops = 2 * (bn * x_aug.shape[1] * w_in.shape[1]       # fused qkv
                 + bn * rf.shape[0] * rf.shape[1]          # fused shifted
                 + 2 * bn * hm * (2 * hd)                  # kv_aug + numer|denom
                 + bn * hd * out_ch)                       # Wo
    bytes_accessed = 4 * (x_aug.size + w_in.size + rf.size + consts.size
                          + bn * out_ch)

    # Whole problem fits in VMEM many times over: no grid, no pipelining —
    # every operand is a single full-array VMEM block (4 input DMAs, 1 output).
    out2 = pl.pallas_call(
        kern,
        out_shape=jax.ShapeDtypeStruct((bn, out_ch), jnp.float32),
        cost_estimate=pl.CostEstimate(flops=flops,
                                      transcendentals=bn * 2 * hm,
                                      bytes_accessed=bytes_accessed),
    )(x_aug, w_in, rf, consts)
    return out2.reshape(bsz, nn, out_ch)


# ------------------------- pure-JAX reference (check) ------------------------
def gkamp_reference(z, feat, tau, params, proj_matrix):
    wq, bq, wk, bk, wv, bv, wo, bo = params
    bsz, nn, _ = feat.shape
    m, d = proj_matrix.shape
    h = wq.shape[1] // d
    q = ((feat @ wq) + bq).reshape(bsz, nn, h, d) / math.sqrt(tau)
    k = ((feat @ wk) + bk).reshape(bsz, nn, h, d) / math.sqrt(tau)
    v = ((z @ wv) + bv).reshape(bsz, nn, h, d)
    dn = 1.0 / math.sqrt(math.sqrt(float(d)))
    ratio = 1.0 / math.sqrt(float(m))
    qs, ks = dn * q, dn * k
    q_dash = jnp.einsum("bnhd,md->bnhm", qs, proj_matrix)
    k_dash = jnp.einsum("bnhd,md->bnhm", ks, proj_matrix)
    dq = 0.5 * jnp.sum(qs * qs, axis=-1, keepdims=True)
    dk = 0.5 * jnp.sum(ks * ks, axis=-1, keepdims=True)
    qp = ratio * (jnp.exp(q_dash - dq - jnp.max(q_dash, axis=-1, keepdims=True)) + EPS)
    kp = ratio * (jnp.exp(k_dash - dk - jnp.max(k_dash)) + EPS)
    kvs = jnp.einsum("bnhm,bnhd->bhmd", kp, v)
    num = jnp.einsum("bnhm,bhmd->bnhd", qp, kvs)
    den = jnp.einsum("bnhm,bhm->bnh", qp, jnp.sum(kp, axis=1))
    z_next = num / den[..., None]
    return z_next.reshape(bsz, nn, h * d) @ wo + bo


# --------------------------- deterministic params ----------------------------
def init_linear(key, fan_in, fan_out):
    """nn.Linear-style uniform init, stored as (in, out)."""
    kw, kb = jax.random.split(key)
    bound = 1.0 / math.sqrt(fan_in)
    w = jax.random.uniform(kw, (fan_in, fan_out), jnp.float32, -bound, bound)
    b = jax.random.uniform(kb, (1, fan_out), jnp.float32, -bound, bound)
    return w, b


if __name__ == "__main__":
    root = jax.random.PRNGKey(0)
    k_feat, k_z, k_q, k_k, k_v, k_o, k_proj = jax.random.split(root, 7)

    feat = jax.random.normal(k_feat, (B, N, C_IN), jnp.float32)
    z = jax.random.normal(k_z, (B, N, C_IN), jnp.float32)
    # dummy edge_index (unused in the eval path with default hyper-params)
    adjs = [jnp.zeros((2, 4), jnp.int32)]

    wq, bq = init_linear(k_q, C_IN, D * H)
    wk, bk = init_linear(k_k, C_IN, D * H)
    wv, bv = init_linear(k_v, C_IN, D * H)
    wo, bo = init_linear(k_o, D * H, D)
    params = (wq, bq, wk, bk, wv, bv, wo, bo)

    # Performer random projection matrix [M, D] (deterministic seed; the PyTorch
    # version seeds it from sum(query), which is torch-RNG-specific).
    proj_matrix = create_projection_matrix(k_proj, M, D)

    packed = pack_gkamp_params(params, proj_matrix, TAU)
    out = gkamp_forward(z, feat, adjs, TAU, packed)
    out = jax.block_until_ready(out)

    assert out.shape == (B, N, D), out.shape
    assert bool(jnp.all(jnp.isfinite(out)))

    ref = gkamp_reference(z, feat, TAU, params, proj_matrix)
    assert bool(jnp.allclose(out, ref, rtol=1e-2, atol=1e-2)), (
        "max abs diff vs reference: %f" % float(jnp.max(jnp.abs(out - ref))))

    print("KERNEL_OK")
</pallas_src>

<mosaic_0001>
module attributes {stable_mosaic.version = 11 : i64} {
  func.func @gkamp_kernel(%arg0: memref<16x33xf32, #tpu.memory_space<vmem>>, %arg1: memref<33x96xf32, #tpu.memory_space<vmem>>, %arg2: memref<128x80xf32, #tpu.memory_space<vmem>>, %arg3: memref<80x64xf32, #tpu.memory_space<vmem>>, %arg4: memref<16x8xf32, #tpu.memory_space<vmem>>) attributes {dimension_semantics = [], scalar_prefetch = 0 : i64, scratch_operands = 0 : i64, tpu.core_type = #tpu.core_type<tc>} {
    %c0 = arith.constant 0 : index
    %c0_0 = arith.constant 0 : index
    %0 = vector.load %arg0[%c0, %c0_0] : memref<16x33xf32, #tpu.memory_space<vmem>>, vector<16x33xf32>
    %c0_1 = arith.constant 0 : index
    %c0_2 = arith.constant 0 : index
    %1 = vector.load %arg1[%c0_1, %c0_2] : memref<33x96xf32, #tpu.memory_space<vmem>>, vector<33x96xf32>
    %cst = arith.constant dense<0.000000e+00> : vector<16x96xf32>
    %2 = tpu.matmul %0, %1, %cst {dimension_numbers = #tpu.dot_dimension_numbers<[1], [0], [0], [1], [0, 0, 1, 1], [], []>} : vector<16x33xf32>, vector<33x96xf32>, vector<16x96xf32> -> vector<16x96xf32>
    %3 = vector.extract_strided_slice %2 {offsets = [0, 0], sizes = [16, 64], strides = [1, 1]} : vector<16x96xf32> to vector<16x64xf32>
    %4 = vector.extract_strided_slice %2 {offsets = [0, 64], sizes = [16, 32], strides = [1, 1]} : vector<16x96xf32> to vector<16x32xf32>
    %5 = arith.mulf %3, %3 : vector<16x64xf32>
    %6 = tpu.concatenate %3, %5 in 1 : vector<16x64xf32>, vector<16x64xf32> -> vector<16x128xf32>
    %c0_3 = arith.constant 0 : index
    %c0_4 = arith.constant 0 : index
    %7 = vector.load %arg2[%c0_3, %c0_4] : memref<128x80xf32, #tpu.memory_space<vmem>>, vector<128x80xf32>
    %cst_5 = arith.constant dense<0.000000e+00> : vector<16x80xf32>
    %8 = tpu.matmul %6, %7, %cst_5 {dimension_numbers = #tpu.dot_dimension_numbers<[1], [0], [0], [1], [0, 0, 1, 1], [], []>} : vector<16x128xf32>, vector<128x80xf32>, vector<16x80xf32> -> vector<16x80xf32>
    %9 = tpu.iota {dimensions = array<i32: 1>} : vector<16x80xi32>
    %cst_6 = arith.constant 0.000000e+00 : f32
    %10 = vector.broadcast %cst_6 : f32 to vector<16x80xf32>
    %c0_i32 = arith.constant 0 : i32
    %11 = vector.broadcast %c0_i32 : i32 to vector<16x80xi32>
    %12 = arith.cmpi sge, %9, %11 : vector<16x80xi32>
    %c10_i32 = arith.constant 10 : i32
    %13 = vector.broadcast %c10_i32 : i32 to vector<16x80xi32>
    %14 = arith.cmpi slt, %9, %13 : vector<16x80xi32>
    %15 = arith.andi %12, %14 : vector<16x80xi1>
    %cst_7 = arith.constant -1.000000e+30 : f32
    %16 = vector.broadcast %cst_7 : f32 to vector<16x80xf32>
    %17 = arith.select %15, %8, %16 : vector<16x80xi1>, vector<16x80xf32>
    %cst_8 = arith.constant dense<0xFF800000> : vector<16xf32>
    %18 = vector.multi_reduction <maximumf>, %17, %cst_8 [1] : vector<16x80xf32> to vector<16xf32>
    %19 = vector.shape_cast %18 : vector<16xf32> to vector<16x1xf32>
    %20 = vector.shape_cast %19 : vector<16x1xf32> to vector<16x1xf32>
    %21 = vector.broadcast %20 : vector<16x1xf32> to vector<16x80xf32>
    %22 = arith.select %15, %21, %10 : vector<16x80xi1>, vector<16x80xf32>
    %c10_i32_9 = arith.constant 10 : i32
    %23 = vector.broadcast %c10_i32_9 : i32 to vector<16x80xi32>
    %24 = arith.cmpi sge, %9, %23 : vector<16x80xi32>
    %c20_i32 = arith.constant 20 : i32
    %25 = vector.broadcast %c20_i32 : i32 to vector<16x80xi32>
    %26 = arith.cmpi slt, %9, %25 : vector<16x80xi32>
    %27 = arith.andi %24, %26 : vector<16x80xi1>
    %cst_10 = arith.constant -1.000000e+30 : f32
    %28 = vector.broadcast %cst_10 : f32 to vector<16x80xf32>
    %29 = arith.select %27, %8, %28 : vector<16x80xi1>, vector<16x80xf32>
    %cst_11 = arith.constant dense<0xFF800000> : vector<16xf32>
    %30 = vector.multi_reduction <maximumf>, %29, %cst_11 [1] : vector<16x80xf32> to vector<16xf32>
    %31 = vector.shape_cast %30 : vector<16xf32> to vector<16x1xf32>
    %32 = vector.shape_cast %31 : vector<16x1xf32> to vector<16x1xf32>
    %33 = vector.broadcast %32 : vector<16x1xf32> to vector<16x80xf32>
    %34 = arith.select %27, %33, %22 : vector<16x80xi1>, vector<16x80xf32>
    %c20_i32_12 = arith.constant 20 : i32
    %35 = vector.broadcast %c20_i32_12 : i32 to vector<16x80xi32>
    %36 = arith.cmpi sge, %9, %35 : vector<16x80xi32>
    %c30_i32 = arith.constant 30 : i32
    %37 = vector.broadcast %c30_i32 : i32 to vector<16x80xi32>
    %38 = arith.cmpi slt, %9, %37 : vector<16x80xi32>
    %39 = arith.andi %36, %38 : vector<16x80xi1>
    %cst_13 = arith.constant -1.000000e+30 : f32
    %40 = vector.broadcast %cst_13 : f32 to vector<16x80xf32>
    %41 = arith.select %39, %8, %40 : vector<16x80xi1>, vector<16x80xf32>
    %cst_14 = arith.constant dense<0xFF800000> : vector<16xf32>
    %42 = vector.multi_reduction <maximumf>, %41, %cst_14 [1] : vector<16x80xf32> to vector<16xf32>
    %43 = vector.shape_cast %42 : vector<16xf32> to vector<16x1xf32>
    %44 = vector.shape_cast %43 : vector<16x1xf32> to vector<16x1xf32>
    %45 = vector.broadcast %44 : vector<16x1xf32> to vector<16x80xf32>
    %46 = arith.select %39, %45, %34 : vector<16x80xi1>, vector<16x80xf32>
    %c30_i32_15 = arith.constant 30 : i32
    %47 = vector.broadcast %c30_i32_15 : i32 to vector<16x80xi32>
    %48 = arith.cmpi sge, %9, %47 : vector<16x80xi32>
    %c40_i32 = arith.constant 40 : i32
    %49 = vector.broadcast %c40_i32 : i32 to vector<16x80xi32>
    %50 = arith.cmpi slt, %9, %49 : vector<16x80xi32>
    %51 = arith.andi %48, %50 : vector<16x80xi1>
    %cst_16 = arith.constant -1.000000e+30 : f32
    %52 = vector.broadcast %cst_16 : f32 to vector<16x80xf32>
    %53 = arith.select %51, %8, %52 : vector<16x80xi1>, vector<16x80xf32>
    %cst_17 = arith.constant dense<0xFF800000> : vector<16xf32>
    %54 = vector.multi_reduction <maximumf>, %53, %cst_17 [1] : vector<16x80xf32> to vector<16xf32>
    %55 = vector.shape_cast %54 : vector<16xf32> to vector<16x1xf32>
    %56 = vector.shape_cast %55 : vector<16x1xf32> to vector<16x1xf32>
    %57 = vector.broadcast %56 : vector<16x1xf32> to vector<16x80xf32>
    %58 = arith.select %51, %57, %46 : vector<16x80xi1>, vector<16x80xf32>
    %c40_i32_18 = arith.constant 40 : i32
    %59 = vector.broadcast %c40_i32_18 : i32 to vector<16x80xi32>
    %60 = arith.cmpi sge, %9, %59 : vector<16x80xi32>
    %cst_19 = arith.constant -1.000000e+30 : f32
    %61 = vector.broadcast %cst_19 : f32 to vector<16x80xf32>
    %62 = arith.select %60, %8, %61 : vector<16x80xi1>, vector<16x80xf32>
    %63 = vector.shape_cast %62 : vector<16x80xf32> to vector<1x16x80xf32>
    %cst_20 = arith.constant dense<0xFF800000> : vector<1xf32>
    %64 = vector.multi_reduction <maximumf>, %63, %cst_20 [1, 2] : vector<1x16x80xf32> to vector<1xf32>
    %65 = vector.shape_cast %64 : vector<1xf32> to vector<1x1x1xf32>
    %66 = vector.extract %65[0, 0, 0] : f32 from vector<1x1x1xf32>
    %67 = vector.broadcast %66 : f32 to vector<16x80xf32>
    %68 = arith.select %60, %67, %58 : vector<16x80xi1>, vector<16x80xf32>
    %69 = arith.subf %8, %68 : vector<16x80xf32>
    %70 = math.exp %69 : vector<16x80xf32>
    %cst_21 = arith.constant 9.99999997E-7 : f32
    %71 = vector.broadcast %cst_21 : f32 to vector<16x80xf32>
    %72 = arith.addf %70, %71 : vector<16x80xf32>
    %cst_22 = arith.constant 0.316227764 : f32
    %73 = vector.broadcast %cst_22 : f32 to vector<16x80xf32>
    %74 = arith.mulf %73, %72 : vector<16x80xf32>
    %75 = vector.extract_strided_slice %74 {offsets = [0, 0], sizes = [16, 40], strides = [1, 1]} : vector<16x80xf32> to vector<16x40xf32>
    %76 = vector.extract_strided_slice %74 {offsets = [0, 40], sizes = [16, 40], strides = [1, 1]} : vector<16x80xf32> to vector<16x40xf32>
    %c0_23 = arith.constant 0 : index
    %c0_24 = arith.constant 0 : index
    %77 = vector.load %arg3[%c0_23, %c0_24] : memref<80x64xf32, #tpu.memory_space<vmem>>, vector<40x64xf32>
    %cst_25 = arith.constant 1.000000e+00 : f32
    %78 = vector.broadcast %cst_25 : f32 to vector<16x32xf32>
    %79 = tpu.concatenate %4, %78 in 1 : vector<16x32xf32>, vector<16x32xf32> -> vector<16x64xf32>
    %80 = vector.extract_strided_slice %75 {offsets = [0, 0], sizes = [8, 40], strides = [1, 1]} : vector<16x40xf32> to vector<8x40xf32>
    %81 = vector.extract_strided_slice %76 {offsets = [0, 0], sizes = [8, 40], strides = [1, 1]} : vector<16x40xf32> to vector<8x40xf32>
    %82 = vector.extract_strided_slice %79 {offsets = [0, 0], sizes = [8, 64], strides = [1, 1]} : vector<16x64xf32> to vector<8x64xf32>
    %cst_26 = arith.constant dense<0.000000e+00> : vector<40x64xf32>
    %83 = tpu.matmul %81, %82, %cst_26 {dimension_numbers = #tpu.dot_dimension_numbers<[0], [0], [1], [1], [0, 1, 1, 1], [], []>} : vector<8x40xf32>, vector<8x64xf32>, vector<40x64xf32> -> vector<40x64xf32>
    %84 = arith.mulf %83, %77 : vector<40x64xf32>
    %cst_27 = arith.constant dense<0.000000e+00> : vector<8x64xf32>
    %85 = tpu.matmul %80, %84, %cst_27 {dimension_numbers = #tpu.dot_dimension_numbers<[1], [0], [0], [1], [0, 0, 1, 1], [], []>} : vector<8x40xf32>, vector<40x64xf32>, vector<8x64xf32> -> vector<8x64xf32>
    %86 = vector.extract_strided_slice %85 {offsets = [0, 0], sizes = [8, 32], strides = [1, 1]} : vector<8x64xf32> to vector<8x32xf32>
    %87 = vector.extract_strided_slice %85 {offsets = [0, 32], sizes = [8, 32], strides = [1, 1]} : vector<8x64xf32> to vector<8x32xf32>
    %88 = tpu.reciprocal %87 {approx = true} : vector<8x32xf32> -> vector<8x32xf32>
    %89 = arith.mulf %86, %88 : vector<8x32xf32>
    %90 = vector.extract_strided_slice %75 {offsets = [8, 0], sizes = [8, 40], strides = [1, 1]} : vector<16x40xf32> to vector<8x40xf32>
    %91 = vector.extract_strided_slice %76 {offsets = [8, 0], sizes = [8, 40], strides = [1, 1]} : vector<16x40xf32> to vector<8x40xf32>
    %92 = vector.extract_strided_slice %79 {offsets = [8, 0], sizes = [8, 64], strides = [1, 1]} : vector<16x64xf32> to vector<8x64xf32>
    %cst_28 = arith.constant dense<0.000000e+00> : vector<40x64xf32>
    %93 = tpu.matmul %91, %92, %cst_28 {dimension_numbers = #tpu.dot_dimension_numbers<[0], [0], [1], [1], [0, 1, 1, 1], [], []>} : vector<8x40xf32>, vector<8x64xf32>, vector<40x64xf32> -> vector<40x64xf32>
    %94 = arith.mulf %93, %77 : vector<40x64xf32>
    %cst_29 = arith.constant dense<0.000000e+00> : vector<8x64xf32>
    %95 = tpu.matmul %90, %94, %cst_29 {dimension_numbers = #tpu.dot_dimension_numbers<[1], [0], [0], [1], [0, 0, 1, 1], [], []>} : vector<8x40xf32>, vector<40x64xf32>, vector<8x64xf32> -> vector<8x64xf32>
    %96 = vector.extract_strided_slice %95 {offsets = [0, 0], sizes = [8, 32], strides = [1, 1]} : vector<8x64xf32> to vector<8x32xf32>
    %97 = vector.extract_strided_slice %95 {offsets = [0, 32], sizes = [8, 32], strides = [1, 1]} : vector<8x64xf32> to vector<8x32xf32>
    %98 = tpu.reciprocal %97 {approx = true} : vector<8x32xf32> -> vector<8x32xf32>
    %99 = arith.mulf %96, %98 : vector<8x32xf32>
    %100 = tpu.concatenate %89, %99 in 0 : vector<8x32xf32>, vector<8x32xf32> -> vector<16x32xf32>
    %c40 = arith.constant 40 : index
    %c0_30 = arith.constant 0 : index
    %101 = vector.load %arg3[%c40, %c0_30] : memref<80x64xf32, #tpu.memory_space<vmem>>, vector<32x8xf32>
    %c72 = arith.constant 72 : index
    %c0_31 = arith.constant 0 : index
    %102 = vector.load %arg3[%c72, %c0_31] : memref<80x64xf32, #tpu.memory_space<vmem>>, vector<1x8xf32>
    %cst_32 = arith.constant dense<0.000000e+00> : vector<16x8xf32>
    %103 = tpu.matmul %100, %101, %cst_32 {dimension_numbers = #tpu.dot_dimension_numbers<[1], [0], [0], [1], [0, 0, 1, 1], [], []>} : vector<16x32xf32>, vector<32x8xf32>, vector<16x8xf32> -> vector<16x8xf32>
    %104 = vector.broadcast %102 : vector<1x8xf32> to vector<16x8xf32>
    %105 = arith.addf %103, %104 : vector<16x8xf32>
    %c0_33 = arith.constant 0 : index
    %c0_34 = arith.constant 0 : index
    %106 = vector.load %arg4[%c0_33, %c0_34] : memref<16x8xf32, #tpu.memory_space<vmem>>, vector<16x8xf32>
    tpu.vector_store %arg4[%c0_33, %c0_34], %105 {strides = array<i32>} : memref<16x8xf32, #tpu.memory_space<vmem>>, vector<16x8xf32>,
    return
  }
}

</mosaic_0001>

<llo_original>
// kernel: tpu_custom_call.1
$region0: #{tpu_custom_call.1}
  #allocation0 [shape = 'u32[]', space=smem, size = 0x4, offset = 0x4, fixed_abs, tag = 'smem constant byte address 0x4 - core index']
  #allocation1 [shape = 'u32[144,128]{1,0:T(1,128)}', space=vmem, size = 0x12000, scoped, tag = 'internal scratch']
  %s0 = inlined_call_operand.vmem [shape: f32[16,33], index: 0, kind: input, shape index: {}]
  %s1 = inlined_call_operand.vmem [shape: f32[33,96], index: 1, kind: input, shape index: {}]
  %s2 = inlined_call_operand.vmem [shape: f32[128,80], index: 2, kind: input, shape index: {}]
  %s3 = inlined_call_operand.vmem [shape: f32[80,64], index: 3, kind: input, shape index: {}]
  %s4 = inlined_call_operand.vmem [shape: f32[16,8], index: 4, kind: output, shape index: {}]
  %s5 = sld [smem:[#allocation0]]
  $region26: #{tpu_custom_call.1} parent=0
    _
  %s7 = ssub.s32 1, %s5
  %s8 = scalar_select 0, %s7, %s5
  // Predicated region
  $region2: #{tpu_custom_call.1} parent=0 // pred_check
    _
  $region3: #{tpu_custom_call.1} parent=0 // pred_check_branch
    %10 = sbr.rel (0) target = $region5
  $region4: #{tpu_custom_call.1} parent=0 // pred_region
    _
  $region5: #{tpu_custom_call.1} parent=0 // pred_fallthru
    _
  // Predicated region
  $region6: #{tpu_custom_call.1} parent=0 // pred_check
    _
  $region7: #{tpu_custom_call.1} parent=0 // pred_check_branch
    %12 = sbr.rel (0) target = $region9
  $region8: #{tpu_custom_call.1} parent=0 // pred_region
    _
  $region9: #{tpu_custom_call.1} parent=0 // pred_fallthru
    _
  // Predicated region
  $region10: #{tpu_custom_call.1} parent=0 // pred_check
    _
  $region11: #{tpu_custom_call.1} parent=0 // pred_check_branch
    %14 = sbr.rel (0) target = $region13
  $region12: #{tpu_custom_call.1} parent=0 // pred_region
    _
  $region13: #{tpu_custom_call.1} parent=0 // pred_fallthru
    _
  // Predicated region
  $region14: #{tpu_custom_call.1} parent=0 // pred_check
    _
  $region15: #{tpu_custom_call.1} parent=0 // pred_check_branch
    %16 = sbr.rel (0) target = $region17
  $region16: #{tpu_custom_call.1} parent=0 // pred_region
    _
  $region17: #{tpu_custom_call.1} parent=0 // pred_fallthru
    _
  %v17 = vld [vmem:[%s0] sm:$0xff]
  %v18 = vld [vmem:[%s0 + $0x8] sm:$0xff]
  %v19 = vld [vmem:[%s1] sm:$0xff]
  %v20 = vld [vmem:[%s1 + $0x8] sm:$0xff]
  %v21 = vld [vmem:[%s1 + $0x10] sm:$0xff]
  %v22 = vld [vmem:[%s1 + $0x18] sm:$0xff]
  %v23 = vld [vmem:[%s1 + $0x20] sm:$0x1]
  %vm24 = vcmask 269312
  %v26 = vsel %vm24, %v17, 0
  %v29 = vsel %vm24, %v18, 0
  %vm31 = vcmask 1040384
  %v33 = vsel %vm31, %v23, 0
  %35 = vmatprep.subr.mxu0 0.0
  %36 = vmatpush1.msra.mxu0 0.0
  %37 = vmatprep.subr.mxu0 0.0
  %38 = vmatpush1.msra.mxu0 0.0
  %39 = vmatprep.subr.mxu0 0.0
  %40 = vmatpush1.msra.mxu0 0.0
  %41 = vmatprep.subr.mxu0 0.0
  %42 = vmatpush1.msra.mxu0 0.0
  %43 = vmatprep.subr.mxu0 0.0
  %44 = vmatpush1.msra.mxu0 0.0
  %45 = vmatprep.subr.mxu0 0.0
  %46 = vmatpush1.msra.mxu0 0.0
  %47 = vmatprep.subr.mxu0 0.0
  %48 = vmatpush1.msra.mxu0 0.0
  %49 = vmatprep.subr.mxu0 0.0
  %50 = vmatpush1.msra.mxu0 0.0
  %51 = vmatprep.subr.mxu0 0.0
  %52 = vmatpush1.msra.mxu0 0.0
  %53 = vmatprep.subr.mxu0 0.0
  %54 = vmatpush1.msra.mxu0 0.0
  %55 = vmatprep.subr.mxu0 0.0
  %56 = vmatpush1.msra.mxu0 0.0
  %57 = vmatprep.subr.mxu0 0.0
  %58 = vmatpush1.msra.mxu0 %v33
  %59 = vmatprep.subr.mxu0 0.0
  %60 = vmatpush1.msra.mxu0 %v22
  %61 = vmatprep.subr.mxu0 0.0
  %62 = vmatpush1.msra.mxu0 %v21
  %63 = vmatprep.subr.mxu0 0.0
  %64 = vmatpush1.msra.mxu0 %v20
  %65 = vmatprep.subr.mxu0 0.0
  %66 = vmatpush1.msra.mxu0 %v19
  %67 = vmatprep.subr.mxu0 0.0
  %68 = vmatpush2.msra.mxu0 0.0
  %69 = vmatprep.subr.mxu0 0.0
  %70 = vmatpush2.msra.mxu0 0.0
  %71 = vmatprep.subr.mxu0 0.0
  %72 = vmatpush2.msra.mxu0 0.0
  %73 = vmatprep.subr.mxu0 0.0
  %74 = vmatpush2.msra.mxu0 0.0
  %75 = vmatprep.subr.mxu0 0.0
  %76 = vmatpush2.msra.mxu0 0.0
  %77 = vmatprep.subr.mxu0 0.0
  %78 = vmatpush2.msra.mxu0 0.0
  %79 = vmatprep.subr.mxu0 0.0
  %80 = vmatpush2.msra.mxu0 0.0
  %81 = vmatprep.subr.mxu0 0.0
  %82 = vmatpush2.msra.mxu0 0.0
  %83 = vmatprep.subr.mxu0 0.0
  %84 = vmatpush2.msra.mxu0 0.0
  %85 = vmatprep.subr.mxu0 0.0
  %86 = vmatpush2.msra.mxu0 0.0
  %87 = vmatprep.subr.mxu0 0.0
  %88 = vmatpush2.msra.mxu0 0.0
  %89 = vmatprep.subr.mxu0 0.0
  %90 = vmatpush2.msra.mxu0 0.0
  %91 = vmatprep.subr.mxu0 0.0
  %92 = vmatpush2.msra.mxu0 0.0
  %93 = vmatprep.subr.mxu0 0.0
  %94 = vmatpush2.msra.mxu0 0.0
  %95 = vmatprep.subr.mxu0 0.0
  %96 = vmatpush2.msra.mxu0 0.0
  %97 = vmatprep.subr.mxu0 0.0
  %98 = vmatpush2.msra.mxu0 0.0
  %99 = vmatprep.mubr.f32.mxu0 0.0
  %100 = vmatmul.mubr.f32.gmra.mxu0 %v26
  %v101 = vpop.f32.mrf.mxu0
  %v102 = vadd.f32 0.0, %v101
  %v103 = vpop.f32.mrf.mxu0
  %104 = vmatprep.mubr.f32.mxu0 0.0
  %105 = vmatmul.mubr.f32.gmra.mxu0 %v29
  %v106 = vpop.f32.mrf.mxu0
  %v107 = vadd.f32 0.0, %v106
  %v108 = vpop.f32.mrf.mxu0
  %109 = vdwg.mxu0
  %v110 = vmul.f32 %v102, %v102
  %v111 = vmul.f32 %v107, %v107
  %114 = vrot.lane.b32.xlu0 %v110, 64
  %v115 = vpop.permute.xlu0 %114
  %116 = vrot.lane.b32.xlu0 %v111, 64
  %v117 = vpop.permute.xlu0 %116
  %vm120 = vcmask 523264
  %v121 = vsel %vm120, %v102, %v115
  %v122 = vsel %vm120, %v107, %v117
  %v123 = vld [vmem:[%s2] sm:$0xff]
  %v124 = vld [vmem:[%s2 + $0x8] sm:$0xff]
  %v125 = vld [vmem:[%s2 + $0x10] sm:$0xff]
  %v126 = vld [vmem:[%s2 + $0x18] sm:$0xff]
  %v127 = vld [vmem:[%s2 + $0x20] sm:$0xff]
  %v128 = vld [vmem:[%s2 + $0x28] sm:$0xff]
  %v129 = vld [vmem:[%s2 + $0x30] sm:$0xff]
  %v130 = vld [vmem:[%s2 + $0x38] sm:$0xff]
  %v131 = vld [vmem:[%s2 + $0x40] sm:$0xff]
  %v132 = vld [vmem:[%s2 + $0x48] sm:$0xff]
  %v133 = vld [vmem:[%s2 + $0x50] sm:$0xff]
  %v134 = vld [vmem:[%s2 + $0x58] sm:$0xff]
  %v135 = vld [vmem:[%s2 + $0x60] sm:$0xff]
  %v136 = vld [vmem:[%s2 + $0x68] sm:$0xff]
  %v137 = vld [vmem:[%s2 + $0x70] sm:$0xff]
  %v138 = vld [vmem:[%s2 + $0x78] sm:$0xff]
  %139 = vmatprep.subr.mxu0 0.0
  %140 = vmatpush1.msra.mxu0 %v138
  %141 = vmatprep.subr.mxu0 0.0
  %142 = vmatpush1.msra.mxu0 %v137
  %143 = vmatprep.subr.mxu0 0.0
  %144 = vmatpush1.msra.mxu0 %v136
  %145 = vmatprep.subr.mxu0 0.0
  %146 = vmatpush1.msra.mxu0 %v135
  %147 = vmatprep.subr.mxu0 0.0
  %148 = vmatpush1.msra.mxu0 %v134
  %149 = vmatprep.subr.mxu0 0.0
  %150 = vmatpush1.msra.mxu0 %v133
  %151 = vmatprep.subr.mxu0 0.0
  %152 = vmatpush1.msra.mxu0 %v132
  %153 = vmatprep.subr.mxu0 0.0
  %154 = vmatpush1.msra.mxu0 %v131
  %155 = vmatprep.subr.mxu0 0.0
  %156 = vmatpush1.msra.mxu0 %v130
  %157 = vmatprep.subr.mxu0 0.0
  %158 = vmatpush1.msra.mxu0 %v129
  %159 = vmatprep.subr.mxu0 0.0
  %160 = vmatpush1.msra.mxu0 %v128
  %161 = vmatprep.subr.mxu0 0.0
  %162 = vmatpush1.msra.mxu0 %v127
  %163 = vmatprep.subr.mxu0 0.0
  %164 = vmatpush1.msra.mxu0 %v126
  %165 = vmatprep.subr.mxu0 0.0
  %166 = vmatpush1.msra.mxu0 %v125
  %167 = vmatprep.subr.mxu0 0.0
  %168 = vmatpush1.msra.mxu0 %v124
  %169 = vmatprep.subr.mxu0 0.0
  %170 = vmatpush1.msra.mxu0 %v123
  %171 = vmatprep.subr.mxu0 0.0
  %172 = vmatpush2.msra.mxu0 0.0
  %173 = vmatprep.subr.mxu0 0.0
  %174 = vmatpush2.msra.mxu0 0.0
  %175 = vmatprep.subr.mxu0 0.0
  %176 = vmatpush2.msra.mxu0 0.0
  %177 = vmatprep.subr.mxu0 0.0
  %178 = vmatpush2.msra.mxu0 0.0
  %179 = vmatprep.subr.mxu0 0.0
  %180 = vmatpush2.msra.mxu0 0.0
  %181 = vmatprep.subr.mxu0 0.0
  %182 = vmatpush2.msra.mxu0 0.0
  %183 = vmatprep.subr.mxu0 0.0
  %184 = vmatpush2.msra.mxu0 0.0
  %185 = vmatprep.subr.mxu0 0.0
  %186 = vmatpush2.msra.mxu0 0.0
  %187 = vmatprep.subr.mxu0 0.0
  %188 = vmatpush2.msra.mxu0 0.0
  %189 = vmatprep.subr.mxu0 0.0
  %190 = vmatpush2.msra.mxu0 0.0
  %191 = vmatprep.subr.mxu0 0.0
  %192 = vmatpush2.msra.mxu0 0.0
  %193 = vmatprep.subr.mxu0 0.0
  %194 = vmatpush2.msra.mxu0 0.0
  %195 = vmatprep.subr.mxu0 0.0
  %196 = vmatpush2.msra.mxu0 0.0
  %197 = vmatprep.subr.mxu0 0.0
  %198 = vmatpush2.msra.mxu0 0.0
  %199 = vmatprep.subr.mxu0 0.0
  %200 = vmatpush2.msra.mxu0 0.0
  %201 = vmatprep.subr.mxu0 0.0
  %202 = vmatpush2.msra.mxu0 0.0
  %203 = vmatprep.mubr.f32.mxu0 0.0
  %204 = vmatmul.mubr.f32.gmra.mxu0 %v121
  %v205 = vpop.f32.mrf.mxu0
  %v206 = vadd.f32 0.0, %v205
  %v207 = vpop.f32.mrf.mxu0
  %208 = vmatprep.mubr.f32.mxu0 0.0
  %209 = vmatmul.mubr.f32.gmra.mxu0 %v122
  %v210 = vpop.f32.mrf.mxu0
  %v211 = vadd.f32 0.0, %v210
  %v212 = vpop.f32.mrf.mxu0
  %213 = vdwg.mxu0
  %v214 = vlaneseq
  %v215 = vand.u32 %v214, 127
  %vm216 = vcmp.ge.s32.totalorder %v215, 0
  %vm217 = vcmp.lt.s32.totalorder %v215, 10
  %vm218 = vmand %vm216, %vm217
  %v219 = vsel %vm218, %v206, -1e+30
  %v220 = vsel %vm218, %v211, -1e+30
  %vm221 = vcmask 654336
  %v222 = vsel %vm221, %v219, -inf
  %223 = vmax.xlane.f32.xlu0 %v222
  %v224 = vpop.xlane.xlu0 %223
  %v225 = vsel %vm221, %v220, -inf
  %226 = vmax.xlane.f32.xlu0 %v225
  %v227 = vpop.xlane.xlu0 %226
  %v228 = vsel %vm218, %v224, 0.0
  %v229 = vsel %vm218, %v227, 0.0
  %vm230 = vcmp.ge.s32.totalorder %v215, 10
  %vm231 = vcmp.lt.s32.totalorder %v215, 20
  %vm232 = vmand %vm230, %vm231
  %v233 = vsel %vm232, %v206, -1e+30
  %v234 = vsel %vm232, %v211, -1e+30
  %v235 = vsel %vm221, %v233, -inf
  %236 = vmax.xlane.f32.xlu0 %v235
  %v237 = vpop.xlane.xlu0 %236
  %v238 = vsel %vm221, %v234, -inf
  %239 = vmax.xlane.f32.xlu0 %v238
  %v240 = vpop.xlane.xlu0 %239
  %v241 = vsel %vm232, %v237, %v228
  %v242 = vsel %vm232, %v240, %v229
  %vm243 = vcmp.ge.s32.totalorder %v215, 20
  %vm244 = vcmp.lt.s32.totalorder %v215, 30
  %vm245 = vmand %vm243, %vm244
  %v246 = vsel %vm245, %v206, -1e+30
  %v247 = vsel %vm245, %v211, -1e+30
  %v248 = vsel %vm221, %v246, -inf
  %249 = vmax.xlane.f32.xlu0 %v248
  %v250 = vpop.xlane.xlu0 %249
  %v251 = vsel %vm221, %v247, -inf
  %252 = vmax.xlane.f32.xlu0 %v251
  %v253 = vpop.xlane.xlu0 %252
  %v254 = vsel %vm245, %v250, %v241
  %v255 = vsel %vm245, %v253, %v242
  %vm256 = vcmp.ge.s32.totalorder %v215, 30
  %vm257 = vcmp.lt.s32.totalorder %v215, 40
  %vm258 = vmand %vm256, %vm257
  %v259 = vsel %vm258, %v206, -1e+30
  %v260 = vsel %vm258, %v211, -1e+30
  %v261 = vsel %vm221, %v259, -inf
  %262 = vmax.xlane.f32.xlu0 %v261
  %v263 = vpop.xlane.xlu0 %262
  %v264 = vsel %vm221, %v260, -inf
  %265 = vmax.xlane.f32.xlu0 %v264
  %v266 = vpop.xlane.xlu0 %265
  %v267 = vsel %vm258, %v263, %v254
  %v268 = vsel %vm258, %v266, %v255
  %vm269 = vcmp.ge.s32.totalorder %v215, 40
  %v270 = vsel %vm269, %v206, -1e+30
  %v271 = vsel %vm269, %v211, -1e+30
  %v272 = vsel %vm221, %v270, -inf
  %v273 = vsel %vm221, %v271, -inf
  %v274 = vmax.f32 %v272, %v273
  %275 = vmax.xlane.f32.xlu0 %v274
  %v276 = vpop.xlane.xlu0 %275
  %v277 = vrot.slane %v276, 4
  %v278 = vmax.f32 %v276, %v277
  %v279 = vrot.slane %v278, 2
  %v280 = vmax.f32 %v278, %v279
  %v281 = vrot.slane %v280, 1
  %v282 = vmax.f32 %v280, %v281
  %s283 = vtos %v282
  %v284 = vstv %s283
  %v285 = vsel %vm269, %v284, %v267
  %v286 = vsel %vm269, %v284, %v268
  %v287 = vsub.f32 %v206, %v285
  %v288 = vsub.f32 %v211, %v286
  %v289 = vmul.f32 %v287, 1.442695
  %v290 = vpow.pop %v289
  %v291 = vmul.f32 %v288, 1.442695
  %v292 = vpow.pop %v291
  %v293 = vadd.f32 %v290, 1e-06
  %v294 = vadd.f32 %v292, 1e-06
  %v295 = vmul.f32 %v293, 0.31622776
  %v296 = vmul.f32 %v294, 0.31622776
  %v297 = vld [vmem:[%s3] sm:$0xff]
  %v298 = vld [vmem:[%s3 + $0x8] sm:$0xff]
  %v299 = vld [vmem:[%s3 + $0x10] sm:$0xff]
  %v300 = vld [vmem:[%s3 + $0x18] sm:$0xff]
  %v301 = vld [vmem:[%s3 + $0x20] sm:$0xff]
  %304 = vrot.lane.b32.xlu0 %v102, 64
  %v305 = vpop.permute.xlu0 %304
  %306 = vrot.lane.b32.xlu0 %v107, 64
  %v307 = vpop.permute.xlu0 %306
  %vm310 = vcmask 261120
  %v311 = vsel %vm310, %v305, 1.0
  %v312 = vsel %vm310, %v307, 1.0
  %314 = vrot.lane.b32.xlu0 %v295, 88
  %v315 = vpop.permute.xlu0 %314
  %317 = vxpose.xlu0.b32.start [1/16] %v315, 128
  %318 = vxpose.xlu0.b32.cont [2/16] 0.0, 128
  %319 = vxpose.xlu0.b32.cont [3/16] 0.0, 128
  %320 = vxpose.xlu0.b32.cont [4/16] 0.0, 128
  %321 = vxpose.xlu0.b32.cont [5/16] 0.0, 128
  %322 = vxpose.xlu0.b32.cont [6/16] 0.0, 128
  %323 = vxpose.xlu0.b32.cont [7/16] 0.0, 128
  %324 = vxpose.xlu0.b32.cont [8/16] 0.0, 128
  %325 = vxpose.xlu0.b32.cont [9/16] 0.0, 128
  %326 = vxpose.xlu0.b32.cont [10/16] 0.0, 128
  %327 = vxpose.xlu0.b32.cont [11/16] 0.0, 128
  %328 = vxpose.xlu0.b32.cont [12/16] 0.0, 128
  %329 = vxpose.xlu0.b32.cont [13/16] 0.0, 128
  %330 = vxpose.xlu0.b32.cont [14/16] 0.0, 128
  %331 = vxpose.xlu0.b32.cont [15/16] 0.0, 128
  %332 = vxpose.xlu0.b32.end [16/16] 0.0, 128
  %v333 = vpop.trf.xlu0
  %v334 = vpop.trf.xlu0
  %v335 = vpop.trf.xlu0
  %v336 = vpop.trf.xlu0
  %v337 = vpop.trf.xlu0
  %v338 = vpop.trf.xlu0
  %v339 = vpop.trf.xlu0
  %v340 = vpop.trf.xlu0
  %v341 = vpop.trf.xlu0
  %v342 = vpop.trf.xlu0
  %v343 = vpop.trf.xlu0
  %v344 = vpop.trf.xlu0
  %v345 = vpop.trf.xlu0
  %v346 = vpop.trf.xlu0
  %v347 = vpop.trf.xlu0
  %v348 = vpop.trf.xlu0
  %vm349 = vcmask 64512
  %v351 = vsel %vm349, %v333, 0
  %v354 = vsel %vm349, %v334, 0
  %v357 = vsel %vm349, %v335, 0
  %v360 = vsel %vm349, %v336, 0
  %v363 = vsel %vm349, %v337, 0
  %365 = vmatprep.subr.mxu0 0.0
  %366 = vmatpush1.msra.mxu0 0.0
  %367 = vmatprep.subr.mxu0 0.0
  %368 = vmatpush1.msra.mxu0 0.0
  %369 = vmatprep.subr.mxu0 0.0
  %370 = vmatpush1.msra.mxu0 0.0
  %371 = vmatprep.subr.mxu0 0.0
  %372 = vmatpush1.msra.mxu0 0.0
  %373 = vmatprep.subr.mxu0 0.0
  %374 = vmatpush1.msra.mxu0 0.0
  %375 = vmatprep.subr.mxu0 0.0
  %376 = vmatpush1.msra.mxu0 0.0
  %377 = vmatprep.subr.mxu0 0.0
  %378 = vmatpush1.msra.mxu0 0.0
  %379 = vmatprep.subr.mxu0 0.0
  %380 = vmatpush1.msra.mxu0 0.0
  %381 = vmatprep.subr.mxu0 0.0
  %382 = vmatpush1.msra.mxu0 0.0
  %383 = vmatprep.subr.mxu0 0.0
  %384 = vmatpush1.msra.mxu0 0.0
  %385 = vmatprep.subr.mxu0 0.0
  %386 = vmatpush1.msra.mxu0 0.0
  %387 = vmatprep.subr.mxu0 0.0
  %388 = vmatpush1.msra.mxu0 0.0
  %389 = vmatprep.subr.mxu0 0.0
  %390 = vmatpush1.msra.mxu0 0.0
  %391 = vmatprep.subr.mxu0 0.0
  %392 = vmatpush1.msra.mxu0 0.0
  %393 = vmatprep.subr.mxu0 0.0
  %394 = vmatpush1.msra.mxu0 0.0
  %395 = vmatprep.subr.mxu0 0.0
  %396 = vmatpush1.msra.mxu0 %v311
  %397 = vmatprep.subr.mxu0 0.0
  %398 = vmatpush2.msra.mxu0 0.0
  %399 = vmatprep.subr.mxu0 0.0
  %400 = vmatpush2.msra.mxu0 0.0
  %401 = vmatprep.subr.mxu0 0.0
  %402 = vmatpush2.msra.mxu0 0.0
  %403 = vmatprep.subr.mxu0 0.0
  %404 = vmatpush2.msra.mxu0 0.0
  %405 = vmatprep.subr.mxu0 0.0
  %406 = vmatpush2.msra.mxu0 0.0
  %407 = vmatprep.subr.mxu0 0.0
  %408 = vmatpush2.msra.mxu0 0.0
  %409 = vmatprep.subr.mxu0 0.0
  %410 = vmatpush2.msra.mxu0 0.0
  %411 = vmatprep.subr.mxu0 0.0
  %412 = vmatpush2.msra.mxu0 0.0
  %413 = vmatprep.subr.mxu0 0.0
  %414 = vmatpush2.msra.mxu0 0.0
  %415 = vmatprep.subr.mxu0 0.0
  %416 = vmatpush2.msra.mxu0 0.0
  %417 = vmatprep.subr.mxu0 0.0
  %418 = vmatpush2.msra.mxu0 0.0
  %419 = vmatprep.subr.mxu0 0.0
  %420 = vmatpush2.msra.mxu0 0.0
  %421 = vmatprep.subr.mxu0 0.0
  %422 = vmatpush2.msra.mxu0 0.0
  %423 = vmatprep.subr.mxu0 0.0
  %424 = vmatpush2.msra.mxu0 0.0
  %425 = vmatprep.subr.mxu0 0.0
  %426 = vmatpush2.msra.mxu0 0.0
  %427 = vmatprep.subr.mxu0 0.0
  %428 = vmatpush2.msra.mxu0 0.0
  %429 = vmatprep.mubr.f32.mxu0 0.0
  %430 = vmatmul.mubr.f32.gmra.mxu0 %v351
  %v431 = vpop.f32.mrf.mxu0
  %v432 = vadd.f32 0.0, %v431
  %v433 = vpop.f32.mrf.mxu0
  %434 = vmatprep.mubr.f32.mxu0 0.0
  %435 = vmatmul.mubr.f32.gmra.mxu0 %v354
  %v436 = vpop.f32.mrf.mxu0
  %v437 = vadd.f32 0.0, %v436
  %v438 = vpop.f32.mrf.mxu0
  %439 = vmatprep.mubr.f32.mxu0 0.0
  %440 = vmatmul.mubr.f32.gmra.mxu0 %v357
  %v441 = vpop.f32.mrf.mxu0
  %v442 = vadd.f32 0.0, %v441
  %v443 = vpop.f32.mrf.mxu0
  %444 = vmatprep.mubr.f32.mxu0 0.0
  %445 = vmatmul.mubr.f32.gmra.mxu0 %v360
  %v446 = vpop.f32.mrf.mxu0
  %v447 = vadd.f32 0.0, %v446
  %v448 = vpop.f32.mrf.mxu0
  %449 = vmatprep.mubr.f32.mxu0 0.0
  %450 = vmatmul.mubr.f32.gmra.mxu0 %v363
  %v451 = vpop.f32.mrf.mxu0
  %v452 = vadd.f32 0.0, %v451
  %v453 = vpop.f32.mrf.mxu0
  %454 = vdwg.mxu0
  %v455 = vmul.f32 %v432, %v297
  %v456 = vmul.f32 %v437, %v298
  %v457 = vmul.f32 %v442, %v299
  %v458 = vmul.f32 %v447, %v300
  %v459 = vmul.f32 %v452, %v301
  %vm460 = vcmask 326656
  %v461 = vsel %vm460, %v295, 0
  %463 = vmatprep.subr.mxu0 0.0
  %464 = vmatpush1.msra.mxu0 0.0
  %465 = vmatprep.subr.mxu0 0.0
  %466 = vmatpush1.msra.mxu0 0.0
  %467 = vmatprep.subr.mxu0 0.0
  %468 = vmatpush1.msra.mxu0 0.0
  %469 = vmatprep.subr.mxu0 0.0
  %470 = vmatpush1.msra.mxu0 0.0
  %471 = vmatprep.subr.mxu0 0.0
  %472 = vmatpush1.msra.mxu0 0.0
  %473 = vmatprep.subr.mxu0 0.0
  %474 = vmatpush1.msra.mxu0 0.0
  %475 = vmatprep.subr.mxu0 0.0
  %476 = vmatpush1.msra.mxu0 0.0
  %477 = vmatprep.subr.mxu0 0.0
  %478 = vmatpush1.msra.mxu0 0.0
  %479 = vmatprep.subr.mxu0 0.0
  %480 = vmatpush1.msra.mxu0 0.0
  %481 = vmatprep.subr.mxu0 0.0
  %482 = vmatpush1.msra.mxu0 0.0
  %483 = vmatprep.subr.mxu0 0.0
  %484 = vmatpush1.msra.mxu0 0.0
  %485 = vmatprep.subr.mxu0 0.0
  %486 = vmatpush1.msra.mxu0 %v459
  %487 = vmatprep.subr.mxu0 0.0
  %488 = vmatpush1.msra.mxu0 %v458
  %489 = vmatprep.subr.mxu0 0.0
  %490 = vmatpush1.msra.mxu0 %v457
  %491 = vmatprep.subr.mxu0 0.0
  %492 = vmatpush1.msra.mxu0 %v456
  %493 = vmatprep.subr.mxu0 0.0
  %494 = vmatpush1.msra.mxu0 %v455
  %495 = vmatprep.subr.mxu0 0.0
  %496 = vmatpush2.msra.mxu0 0.0
  %497 = vmatprep.subr.mxu0 0.0
  %498 = vmatpush2.msra.mxu0 0.0
  %499 = vmatprep.subr.mxu0 0.0
  %500 = vmatpush2.msra.mxu0 0.0
  %501 = vmatprep.subr.mxu0 0.0
  %502 = vmatpush2.msra.mxu0 0.0
  %503 = vmatprep.subr.mxu0 0.0
  %504 = vmatpush2.msra.mxu0 0.0
  %505 = vmatprep.subr.mxu0 0.0
  %506 = vmatpush2.msra.mxu0 0.0
  %507 = vmatprep.subr.mxu0 0.0
  %508 = vmatpush2.msra.mxu0 0.0
  %509 = vmatprep.subr.mxu0 0.0
  %510 = vmatpush2.msra.mxu0 0.0
  %511 = vmatprep.subr.mxu0 0.0
  %512 = vmatpush2.msra.mxu0 0.0
  %513 = vmatprep.subr.mxu0 0.0
  %514 = vmatpush2.msra.mxu0 0.0
  %515 = vmatprep.subr.mxu0 0.0
  %516 = vmatpush2.msra.mxu0 0.0
  %517 = vmatprep.subr.mxu0 0.0
  %518 = vmatpush2.msra.mxu0 0.0
  %519 = vmatprep.subr.mxu0 0.0
  %520 = vmatpush2.msra.mxu0 0.0
  %521 = vmatprep.subr.mxu0 0.0
  %522 = vmatpush2.msra.mxu0 0.0
  %523 = vmatprep.subr.mxu0 0.0
  %524 = vmatpush2.msra.mxu0 0.0
  %525 = vmatprep.subr.mxu0 0.0
  %526 = vmatpush2.msra.mxu0 0.0
  %527 = vmatprep.mubr.f32.mxu0 0.0
  %528 = vmatmul.mubr.f32.gmra.mxu0 %v461
  %v529 = vpop.f32.mrf.mxu0
  %v530 = vadd.f32 0.0, %v529
  %v531 = vpop.f32.mrf.mxu0
  %532 = vdwg.mxu0
  %v533 = vrcp.pop %v530
  %535 = vrot.lane.b32.xlu0 %v533, 96
  %v536 = vpop.permute.xlu0 %535
  %v538 = vmul.f32 %v530, %v536
  %540 = vrot.lane.b32.xlu0 %v296, 88
  %v541 = vpop.permute.xlu0 %540
  %543 = vxpose.xlu0.b32.start [1/16] %v541, 128
  %544 = vxpose.xlu0.b32.cont [2/16] 0.0, 128
  %545 = vxpose.xlu0.b32.cont [3/16] 0.0, 128
  %546 = vxpose.xlu0.b32.cont [4/16] 0.0, 128
  %547 = vxpose.xlu0.b32.cont [5/16] 0.0, 128
  %548 = vxpose.xlu0.b32.cont [6/16] 0.0, 128
  %549 = vxpose.xlu0.b32.cont [7/16] 0.0, 128
  %550 = vxpose.xlu0.b32.cont [8/16] 0.0, 128
  %551 = vxpose.xlu0.b32.cont [9/16] 0.0, 128
  %552 = vxpose.xlu0.b32.cont [10/16] 0.0, 128
  %553 = vxpose.xlu0.b32.cont [11/16] 0.0, 128
  %554 = vxpose.xlu0.b32.cont [12/16] 0.0, 128
  %555 = vxpose.xlu0.b32.cont [13/16] 0.0, 128
  %556 = vxpose.xlu0.b32.cont [14/16] 0.0, 128
  %557 = vxpose.xlu0.b32.cont [15/16] 0.0, 128
  %558 = vxpose.xlu0.b32.end [16/16] 0.0, 128
  %v559 = vpop.trf.xlu0
  %v560 = vpop.trf.xlu0
  %v561 = vpop.trf.xlu0
  %v562 = vpop.trf.xlu0
  %v563 = vpop.trf.xlu0
  %v564 = vpop.trf.xlu0
  %v565 = vpop.trf.xlu0
  %v566 = vpop.trf.xlu0
  %v567 = vpop.trf.xlu0
  %v568 = vpop.trf.xlu0
  %v569 = vpop.trf.xlu0
  %v570 = vpop.trf.xlu0
  %v571 = vpop.trf.xlu0
  %v572 = vpop.trf.xlu0
  %v573 = vpop.trf.xlu0
  %v574 = vpop.trf.xlu0
  %v576 = vsel %vm349, %v559, 0
  %v579 = vsel %vm349, %v560, 0
  %v582 = vsel %vm349, %v561, 0
  %v585 = vsel %vm349, %v562, 0
  %v588 = vsel %vm349, %v563, 0
  %590 = vmatprep.subr.mxu0 0.0
  %591 = vmatpush1.msra.mxu0 0.0
  %592 = vmatprep.subr.mxu0 0.0
  %593 = vmatpush1.msra.mxu0 0.0
  %594 = vmatprep.subr.mxu0 0.0
  %595 = vmatpush1.msra.mxu0 0.0
  %596 = vmatprep.subr.mxu0 0.0
  %597 = vmatpush1.msra.mxu0 0.0
  %598 = vmatprep.subr.mxu0 0.0
  %599 = vmatpush1.msra.mxu0 0.0
  %600 = vmatprep.subr.mxu0 0.0
  %601 = vmatpush1.msra.mxu0 0.0
  %602 = vmatprep.subr.mxu0 0.0
  %603 = vmatpush1.msra.mxu0 0.0
  %604 = vmatprep.subr.mxu0 0.0
  %605 = vmatpush1.msra.mxu0 0.0
  %606 = vmatprep.subr.mxu0 0.0
  %607 = vmatpush1.msra.mxu0 0.0
  %608 = vmatprep.subr.mxu0 0.0
  %609 = vmatpush1.msra.mxu0 0.0
  %610 = vmatprep.subr.mxu0 0.0
  %611 = vmatpush1.msra.mxu0 0.0
  %612 = vmatprep.subr.mxu0 0.0
  %613 = vmatpush1.msra.mxu0 0.0
  %614 = vmatprep.subr.mxu0 0.0
  %615 = vmatpush1.msra.mxu0 0.0
  %616 = vmatprep.subr.mxu0 0.0
  %617 = vmatpush1.msra.mxu0 0.0
  %618 = vmatprep.subr.mxu0 0.0
  %619 = vmatpush1.msra.mxu0 0.0
  %620 = vmatprep.subr.mxu0 0.0
  %621 = vmatpush1.msra.mxu0 %v312
  %622 = vmatprep.subr.mxu0 0.0
  %623 = vmatpush2.msra.mxu0 0.0
  %624 = vmatprep.subr.mxu0 0.0
  %625 = vmatpush2.msra.mxu0 0.0
  %626 = vmatprep.subr.mxu0 0.0
  %627 = vmatpush2.msra.mxu0 0.0
  %628 = vmatprep.subr.mxu0 0.0
  %629 = vmatpush2.msra.mxu0 0.0
  %630 = vmatprep.subr.mxu0 0.0
  %631 = vmatpush2.msra.mxu0 0.0
  %632 = vmatprep.subr.mxu0 0.0
  %633 = vmatpush2.msra.mxu0 0.0
  %634 = vmatprep.subr.mxu0 0.0
  %635 = vmatpush2.msra.mxu0 0.0
  %636 = vmatprep.subr.mxu0 0.0
  %637 = vmatpush2.msra.mxu0 0.0
  %638 = vmatprep.subr.mxu0 0.0
  %639 = vmatpush2.msra.mxu0 0.0
  %640 = vmatprep.subr.mxu0 0.0
  %641 = vmatpush2.msra.mxu0 0.0
  %642 = vmatprep.subr.mxu0 0.0
  %643 = vmatpush2.msra.mxu0 0.0
  %644 = vmatprep.subr.mxu0 0.0
  %645 = vmatpush2.msra.mxu0 0.0
  %646 = vmatprep.subr.mxu0 0.0
  %647 = vmatpush2.msra.mxu0 0.0
  %648 = vmatprep.subr.mxu0 0.0
  %649 = vmatpush2.msra.mxu0 0.0
  %650 = vmatprep.subr.mxu0 0.0
  %651 = vmatpush2.msra.mxu0 0.0
  %652 = vmatprep.subr.mxu0 0.0
  %653 = vmatpush2.msra.mxu0 0.0
  %654 = vmatprep.mubr.f32.mxu0 0.0
  %655 = vmatmul.mubr.f32.gmra.mxu0 %v576
  %v656 = vpop.f32.mrf.mxu0
  %v657 = vadd.f32 0.0, %v656
  %v658 = vpop.f32.mrf.mxu0
  %659 = vmatprep.mubr.f32.mxu0 0.0
  %660 = vmatmul.mubr.f32.gmra.mxu0 %v579
  %v661 = vpop.f32.mrf.mxu0
  %v662 = vadd.f32 0.0, %v661
  %v663 = vpop.f32.mrf.mxu0
  %664 = vmatprep.mubr.f32.mxu0 0.0
  %665 = vmatmul.mubr.f32.gmra.mxu0 %v582
  %v666 = vpop.f32.mrf.mxu0
  %v667 = vadd.f32 0.0, %v666
  %v668 = vpop.f32.mrf.mxu0
  %669 = vmatprep.mubr.f32.mxu0 0.0
  %670 = vmatmul.mubr.f32.gmra.mxu0 %v585
  %v671 = vpop.f32.mrf.mxu0
  %v672 = vadd.f32 0.0, %v671
  %v673 = vpop.f32.mrf.mxu0
  %674 = vmatprep.mubr.f32.mxu0 0.0
  %675 = vmatmul.mubr.f32.gmra.mxu0 %v588
  %v676 = vpop.f32.mrf.mxu0
  %v677 = vadd.f32 0.0, %v676
  %v678 = vpop.f32.mrf.mxu0
  %679 = vdwg.mxu0
  %v680 = vmul.f32 %v657, %v297
  %v681 = vmul.f32 %v662, %v298
  %v682 = vmul.f32 %v667, %v299
  %v683 = vmul.f32 %v672, %v300
  %v684 = vmul.f32 %v677, %v301
  %v685 = vsel %vm460, %v296, 0
  %687 = vmatprep.subr.mxu0 0.0
  %688 = vmatpush1.msra.mxu0 0.0
  %689 = vmatprep.subr.mxu0 0.0
  %690 = vmatpush1.msra.mxu0 0.0
  %691 = vmatprep.subr.mxu0 0.0
  %692 = vmatpush1.msra.mxu0 0.0
  %693 = vmatprep.subr.mxu0 0.0
  %694 = vmatpush1.msra.mxu0 0.0
  %695 = vmatprep.subr.mxu0 0.0
  %696 = vmatpush1.msra.mxu0 0.0
  %697 = vmatprep.subr.mxu0 0.0
  %698 = vmatpush1.msra.mxu0 0.0
  %699 = vmatprep.subr.mxu0 0.0
  %700 = vmatpush1.msra.mxu0 0.0
  %701 = vmatprep.subr.mxu0 0.0
  %702 = vmatpush1.msra.mxu0 0.0
  %703 = vmatprep.subr.mxu0 0.0
  %704 = vmatpush1.msra.mxu0 0.0
  %705 = vmatprep.subr.mxu0 0.0
  %706 = vmatpush1.msra.mxu0 0.0
  %707 = vmatprep.subr.mxu0 0.0
  %708 = vmatpush1.msra.mxu0 0.0
  %709 = vmatprep.subr.mxu0 0.0
  %710 = vmatpush1.msra.mxu0 %v684
  %711 = vmatprep.subr.mxu0 0.0
  %712 = vmatpush1.msra.mxu0 %v683
  %713 = vmatprep.subr.mxu0 0.0
  %714 = vmatpush1.msra.mxu0 %v682
  %715 = vmatprep.subr.mxu0 0.0
  %716 = vmatpush1.msra.mxu0 %v681
  %717 = vmatprep.subr.mxu0 0.0
  %718 = vmatpush1.msra.mxu0 %v680
  %719 = vmatprep.subr.mxu0 0.0
  %720 = vmatpush2.msra.mxu0 0.0
  %721 = vmatprep.subr.mxu0 0.0
  %722 = vmatpush2.msra.mxu0 0.0
  %723 = vmatprep.subr.mxu0 0.0
  %724 = vmatpush2.msra.mxu0 0.0
  %725 = vmatprep.subr.mxu0 0.0
  %726 = vmatpush2.msra.mxu0 0.0
  %727 = vmatprep.subr.mxu0 0.0
  %728 = vmatpush2.msra.mxu0 0.0
  %729 = vmatprep.subr.mxu0 0.0
  %730 = vmatpush2.msra.mxu0 0.0
  %731 = vmatprep.subr.mxu0 0.0
  %732 = vmatpush2.msra.mxu0 0.0
  %733 = vmatprep.subr.mxu0 0.0
  %734 = vmatpush2.msra.mxu0 0.0
  %735 = vmatprep.subr.mxu0 0.0
  %736 = vmatpush2.msra.mxu0 0.0
  %737 = vmatprep.subr.mxu0 0.0
  %738 = vmatpush2.msra.mxu0 0.0
  %739 = vmatprep.subr.mxu0 0.0
  %740 = vmatpush2.msra.mxu0 0.0
  %741 = vmatprep.subr.mxu0 0.0
  %742 = vmatpush2.msra.mxu0 0.0
  %743 = vmatprep.subr.mxu0 0.0
  %744 = vmatpush2.msra.mxu0 0.0
  %745 = vmatprep.subr.mxu0 0.0
  %746 = vmatpush2.msra.mxu0 0.0
  %747 = vmatprep.subr.mxu0 0.0
  %748 = vmatpush2.msra.mxu0 0.0
  %749 = vmatprep.subr.mxu0 0.0
  %750 = vmatpush2.msra.mxu0 0.0
  %751 = vmatprep.mubr.f32.mxu0 0.0
  %752 = vmatmul.mubr.f32.gmra.mxu0 %v685
  %v753 = vpop.f32.mrf.mxu0
  %v754 = vadd.f32 0.0, %v753
  %v755 = vpop.f32.mrf.mxu0
  %756 = vdwg.mxu0
  %v757 = vrcp.pop %v754
  %759 = vrot.lane.b32.xlu0 %v757, 96
  %v760 = vpop.permute.xlu0 %759
  %v762 = vmul.f32 %v754, %v760
  %v763 = vld [vmem:[%s3 + $0x28] sm:$0xff]
  %v764 = vld [vmem:[%s3 + $0x30] sm:$0xff]
  %v765 = vld [vmem:[%s3 + $0x38] sm:$0xff]
  %v766 = vld [vmem:[%s3 + $0x40] sm:$0xff]
  %v767 = vld [vmem:[%s3 + $0x48] sm:$0x1]
  %v768 = vlaneseq
  %v769 = vshrl.u32 %v768, 7
  %v770 = vsub.s32 0, %v769
  %v771 = vrot.slane %v767, %v770
  %v773 = vsel %vm310, %v538, 0
  %v776 = vsel %vm310, %v762, 0
  %778 = vmatprep.subr.mxu0 0.0
  %779 = vmatpush1.msra.mxu0 0.0
  %780 = vmatprep.subr.mxu0 0.0
  %781 = vmatpush1.msra.mxu0 0.0
  %782 = vmatprep.subr.mxu0 0.0
  %783 = vmatpush1.msra.mxu0 0.0
  %784 = vmatprep.subr.mxu0 0.0
  %785 = vmatpush1.msra.mxu0 0.0
  %786 = vmatprep.subr.mxu0 0.0
  %787 = vmatpush1.msra.mxu0 0.0
  %788 = vmatprep.subr.mxu0 0.0
  %789 = vmatpush1.msra.mxu0 0.0
  %790 = vmatprep.subr.mxu0 0.0
  %791 = vmatpush1.msra.mxu0 0.0
  %792 = vmatprep.subr.mxu0 0.0
  %793 = vmatpush1.msra.mxu0 0.0
  %794 = vmatprep.subr.mxu0 0.0
  %795 = vmatpush1.msra.mxu0 0.0
  %796 = vmatprep.subr.mxu0 0.0
  %797 = vmatpush1.msra.mxu0 0.0
  %798 = vmatprep.subr.mxu0 0.0
  %799 = vmatpush1.msra.mxu0 0.0
  %800 = vmatprep.subr.mxu0 0.0
  %801 = vmatpush1.msra.mxu0 0.0
  %802 = vmatprep.subr.mxu0 0.0
  %803 = vmatpush1.msra.mxu0 %v766
  %804 = vmatprep.subr.mxu0 0.0
  %805 = vmatpush1.msra.mxu0 %v765
  %806 = vmatprep.subr.mxu0 0.0
  %807 = vmatpush1.msra.mxu0 %v764
  %808 = vmatprep.subr.mxu0 0.0
  %809 = vmatpush1.msra.mxu0 %v763
  %810 = vmatprep.subr.mxu0 0.0
  %811 = vmatpush2.msra.mxu0 0.0
  %812 = vmatprep.subr.mxu0 0.0
  %813 = vmatpush2.msra.mxu0 0.0
  %814 = vmatprep.subr.mxu0 0.0
  %815 = vmatpush2.msra.mxu0 0.0
  %816 = vmatprep.subr.mxu0 0.0
  %817 = vmatpush2.msra.mxu0 0.0
  %818 = vmatprep.subr.mxu0 0.0
  %819 = vmatpush2.msra.mxu0 0.0
  %820 = vmatprep.subr.mxu0 0.0
  %821 = vmatpush2.msra.mxu0 0.0
  %822 = vmatprep.subr.mxu0 0.0
  %823 = vmatpush2.msra.mxu0 0.0
  %824 = vmatprep.subr.mxu0 0.0
  %825 = vmatpush2.msra.mxu0 0.0
  %826 = vmatprep.subr.mxu0 0.0
  %827 = vmatpush2.msra.mxu0 0.0
  %828 = vmatprep.subr.mxu0 0.0
  %829 = vmatpush2.msra.mxu0 0.0
  %830 = vmatprep.subr.mxu0 0.0
  %831 = vmatpush2.msra.mxu0 0.0
  %832 = vmatprep.subr.mxu0 0.0
  %833 = vmatpush2.msra.mxu0 0.0
  %834 = vmatprep.subr.mxu0 0.0
  %835 = vmatpush2.msra.mxu0 0.0
  %836 = vmatprep.subr.mxu0 0.0
  %837 = vmatpush2.msra.mxu0 0.0
  %838 = vmatprep.subr.mxu0 0.0
  %839 = vmatpush2.msra.mxu0 0.0
  %840 = vmatprep.subr.mxu0 0.0
  %841 = vmatpush2.msra.mxu0 0.0
  %842 = vmatprep.mubr.f32.mxu0 0.0
  %843 = vmatmul.mubr.f32.gmra.mxu0 %v773
  %v844 = vpop.f32.mrf.mxu0
  %v845 = vadd.f32 %v771, %v844
  %v846 = vpop.f32.mrf.mxu0
  %847 = vmatprep.mubr.f32.mxu0 0.0
  %848 = vmatmul.mubr.f32.gmra.mxu0 %v776
  %v849 = vpop.f32.mrf.mxu0
  %v850 = vadd.f32 %v771, %v849
  %v851 = vpop.f32.mrf.mxu0
  %852 = vdwg.mxu0
  %853 = vst.msk [vmem:[%s4] sm:$0xff] %vm349, %v845
  %854 = vst.msk [vmem:[%s4 + $0x8] sm:$0xff] %vm349, %v850
  // Predicated region
  $region18: #{tpu_custom_call.1} parent=0 // pred_check
    _
  $region19: #{tpu_custom_call.1} parent=0 // pred_check_branch
    %856 = sbr.rel (0) target = $region21
  $region20: #{tpu_custom_call.1} parent=0 // pred_region
    _
  $region21: #{tpu_custom_call.1} parent=0 // pred_fallthru
    _
  // Predicated region
  $region22: #{tpu_custom_call.1} parent=0 // pred_check
    _
  $region23: #{tpu_custom_call.1} parent=0 // pred_check_branch
    %858 = sbr.rel (0) target = $region25
  $region24: #{tpu_custom_call.1} parent=0 // pred_region
    _
  $region25: #{tpu_custom_call.1} parent=0 // pred_fallthru
    _

</llo_original>
